<compile_context>
chip_gen: v7x
topology: tpu7x:2x2x1
jax: 0.10.0
libtpu: 0.0.40
codegen_flags: <defaults>
</compile_context>

<pallas_src>
import functools
import math

import jax
import jax.numpy as jnp
from jax.experimental import pallas as pl
from jax.experimental.pallas import tpu as pltpu


# ----------------------------------------------------------------------------
# Pallas kernel: single-shot fused projection -> residual -> LayerNorm
# ----------------------------------------------------------------------------
def _label_self_attention_kernel(x_ref, wt_ref, b_ref, gamma_ref, beta_ref,
                                 o_ref, *, inv_e):
    x = x_ref[...]                                           # (N, E) f32
    # Fused V->out projection on the MXU: bf16 operands, f32 accumulation.
    proj = jnp.dot(x.astype(wt_ref.dtype), wt_ref[...],
                   preferred_element_type=jnp.float32)       # (N, E) f32
    # Residual kept explicit in f32 (not folded into the bf16 weight).
    y = x + proj + b_ref[...]
    # LayerNorm, eps = 1e-5, two-pass variance for numerical safety.
    mean = jnp.sum(y, axis=-1, keepdims=True) * inv_e
    d = y - mean
    var = jnp.sum(d * d, axis=-1, keepdims=True) * inv_e
    y = d * jax.lax.rsqrt(var + jnp.float32(1e-5))
    o_ref[...] = (y * gamma_ref[...] + beta_ref[...]).astype(o_ref.dtype)


# ----------------------------------------------------------------------------
# Wrapper: parameter fusion (trace-time, const-folded under jit) + pallas_call
# ----------------------------------------------------------------------------
def label_self_attention(x, params):
    """x: (num_classes, embed_dim) float32 -> (num_classes, embed_dim)."""
    n, e = x.shape

    # Split the fused in_proj (3E, E) exactly like PyTorch: [Q; K; V].
    w_v = params["in_proj_weight"][2 * e:, :]      # (E, E)
    b_v = params["in_proj_bias"][:, 2 * e:]        # (1, E)
    w_o = params["out_proj_weight"]                # (E, E)
    b_o = params["out_proj_bias"]                  # (1, E)
    gamma = params["ln_weight"]                    # (1, E)
    beta = params["ln_bias"]                       # (1, E)

    # One-time algebraic fusion:
    #   (x @ Wv^T + bv) @ Wo^T + bo  ==  x @ (Wv^T @ Wo^T) + (bv @ Wo^T + bo)
    # Stored pre-transposed; cast to bf16 (dominant HBM term), bias stays f32.
    w_fused_t = (w_v.T @ w_o.T).astype(jnp.bfloat16)         # (E, E) bf16
    b_fused = (b_v @ w_o.T + b_o).astype(jnp.float32)        # (1, E) f32

    kernel = functools.partial(_label_self_attention_kernel, inv_e=1.0 / e)

    cost = pl.CostEstimate(
        flops=2 * n * e * e,
        transcendentals=n,                                   # one rsqrt per row
        bytes_accessed=2 * n * e * 4 + e * e * 2 + 3 * e * 4,
    )

    vmem_spec = pl.BlockSpec(memory_space=pltpu.MemorySpace.VMEM)
    return pl.pallas_call(
        kernel,
        out_shape=jax.ShapeDtypeStruct((n, e), x.dtype),
        in_specs=[vmem_spec] * 5,      # everything fully VMEM-resident
        out_specs=vmem_spec,
        cost_estimate=cost,
    )(x, w_fused_t, b_fused, gamma, beta)


# ----------------------------------------------------------------------------
# Pure-JAX reference (mirrors PyTorch MultiheadAttention with seq_len == 1)
# ----------------------------------------------------------------------------
def reference(x, params):
    e = x.shape[1]
    qkv = x @ params["in_proj_weight"].T + params["in_proj_bias"][0]
    v = qkv[:, 2 * e:]
    # softmax over a single key is exactly 1 -> attention output == v
    attn = v @ params["out_proj_weight"].T + params["out_proj_bias"][0]
    y = x + attn
    mean = jnp.mean(y, axis=-1, keepdims=True)
    var = jnp.mean((y - mean) ** 2, axis=-1, keepdims=True)
    return (y - mean) / jnp.sqrt(var + 1e-5) * params["ln_weight"][0] + params["ln_bias"][0]


# ----------------------------------------------------------------------------
# Deterministic parameter init (shapes from LabelSelfAttention.__init__)
# ----------------------------------------------------------------------------
def init_params(key, embed_dim):
    k1, k2, k3, k4 = jax.random.split(key, 4)
    bound = 1.0 / math.sqrt(embed_dim)
    return {
        "in_proj_weight": jax.random.uniform(k1, (3 * embed_dim, embed_dim),
                                             jnp.float32, -bound, bound),
        "in_proj_bias": jax.random.uniform(k2, (1, 3 * embed_dim),
                                           jnp.float32, -bound, bound),
        "out_proj_weight": jax.random.uniform(k3, (embed_dim, embed_dim),
                                              jnp.float32, -bound, bound),
        "out_proj_bias": jax.random.uniform(k4, (1, embed_dim),
                                            jnp.float32, -bound, bound),
        "ln_weight": jnp.ones((1, embed_dim), jnp.float32),
        "ln_bias": jnp.zeros((1, embed_dim), jnp.float32),
    }


if __name__ == "__main__":
    num_classes = 16     # stands in for the COCO category-query count (~80)
    embed_dim = 256      # small stand-in for 768 (lane-aligned: multiple of 128)
    num_heads = 8        # unused on the hot path: softmax over 1 key == 1

    key = jax.random.PRNGKey(0)
    k_x, k_p = jax.random.split(key)
    x = jax.random.normal(k_x, (num_classes, embed_dim), jnp.float32)
    params = init_params(k_p, embed_dim)

    out = label_self_attention(x, params)
    out = jax.block_until_ready(out)

    ref = reference(x, params)
    assert out.shape == (num_classes, embed_dim)
    # The fused weight is held in bf16 (f32 MXU accumulation); the residual and
    # LayerNorm stay f32, so the error is ~1e-3 — 2e-2 tolerance is ample.
    assert jnp.allclose(out, ref, atol=2e-2, rtol=2e-2), "mismatch vs reference"

    print("KERNEL_OK")
</pallas_src>

<mosaic_0001>
module attributes {stable_mosaic.version = 11 : i64} {
  func.func @_label_self_attention_kernel(%arg0: memref<16x256xf32, #tpu.memory_space<vmem>>, %arg1: memref<256x256xbf16, #tpu.memory_space<vmem>>, %arg2: memref<1x256xf32, #tpu.memory_space<vmem>>, %arg3: memref<1x256xf32, #tpu.memory_space<vmem>>, %arg4: memref<1x256xf32, #tpu.memory_space<vmem>>, %arg5: memref<16x256xf32, #tpu.memory_space<vmem>>) attributes {dimension_semantics = [], scalar_prefetch = 0 : i64, scratch_operands = 0 : i64, tpu.core_type = #tpu.core_type<tc>} {
    %c0 = arith.constant 0 : index
    %c0_0 = arith.constant 0 : index
    %0 = vector.load %arg0[%c0, %c0_0] : memref<16x256xf32, #tpu.memory_space<vmem>>, vector<16x256xf32>
    %1 = arith.truncf %0 : vector<16x256xf32> to vector<16x256xbf16>
    %c0_1 = arith.constant 0 : index
    %c0_2 = arith.constant 0 : index
    %2 = vector.load %arg1[%c0_1, %c0_2] : memref<256x256xbf16, #tpu.memory_space<vmem>>, vector<256x256xbf16>
    %cst = arith.constant dense<0.000000e+00> : vector<16x256xf32>
    %3 = tpu.matmul %1, %2, %cst {dimension_numbers = #tpu.dot_dimension_numbers<[1], [0], [0], [1], [0, 0, 1, 1], [], []>} : vector<16x256xbf16>, vector<256x256xbf16>, vector<16x256xf32> -> vector<16x256xf32>
    %4 = arith.addf %0, %3 : vector<16x256xf32>
    %c0_3 = arith.constant 0 : index
    %c0_4 = arith.constant 0 : index
    %5 = vector.load %arg2[%c0_3, %c0_4] : memref<1x256xf32, #tpu.memory_space<vmem>>, vector<1x256xf32>
    %6 = vector.broadcast %5 : vector<1x256xf32> to vector<16x256xf32>
    %7 = arith.addf %4, %6 : vector<16x256xf32>
    %cst_5 = arith.constant dense<0.000000e+00> : vector<16xf32>
    %8 = vector.multi_reduction <add>, %7, %cst_5 [1] : vector<16x256xf32> to vector<16xf32>
    %9 = vector.shape_cast %8 : vector<16xf32> to vector<16x1xf32>
    %cst_6 = arith.constant 3.906250e-03 : f32
    %10 = vector.broadcast %cst_6 : f32 to vector<16x1xf32>
    %11 = arith.mulf %9, %10 : vector<16x1xf32>
    %12 = vector.broadcast %11 : vector<16x1xf32> to vector<16x256xf32>
    %13 = arith.subf %7, %12 : vector<16x256xf32>
    %14 = arith.mulf %13, %13 : vector<16x256xf32>
    %cst_7 = arith.constant dense<0.000000e+00> : vector<16xf32>
    %15 = vector.multi_reduction <add>, %14, %cst_7 [1] : vector<16x256xf32> to vector<16xf32>
    %16 = vector.shape_cast %15 : vector<16xf32> to vector<16x1xf32>
    %cst_8 = arith.constant 3.906250e-03 : f32
    %17 = vector.broadcast %cst_8 : f32 to vector<16x1xf32>
    %18 = arith.mulf %16, %17 : vector<16x1xf32>
    %cst_9 = arith.constant 9.99999974E-6 : f32
    %19 = vector.broadcast %cst_9 : f32 to vector<16x1xf32>
    %20 = arith.addf %18, %19 : vector<16x1xf32>
    %21 = math.rsqrt %20 : vector<16x1xf32>
    %22 = vector.broadcast %21 : vector<16x1xf32> to vector<16x256xf32>
    %23 = arith.mulf %13, %22 : vector<16x256xf32>
    %c0_10 = arith.constant 0 : index
    %c0_11 = arith.constant 0 : index
    %24 = vector.load %arg3[%c0_10, %c0_11] : memref<1x256xf32, #tpu.memory_space<vmem>>, vector<1x256xf32>
    %25 = vector.broadcast %24 : vector<1x256xf32> to vector<16x256xf32>
    %26 = arith.mulf %23, %25 : vector<16x256xf32>
    %c0_12 = arith.constant 0 : index
    %c0_13 = arith.constant 0 : index
    %27 = vector.load %arg4[%c0_12, %c0_13] : memref<1x256xf32, #tpu.memory_space<vmem>>, vector<1x256xf32>
    %28 = vector.broadcast %27 : vector<1x256xf32> to vector<16x256xf32>
    %29 = arith.addf %26, %28 : vector<16x256xf32>
    %c0_14 = arith.constant 0 : index
    %c0_15 = arith.constant 0 : index
    %30 = vector.load %arg5[%c0_14, %c0_15] : memref<16x256xf32, #tpu.memory_space<vmem>>, vector<16x256xf32>
    tpu.vector_store %arg5[%c0_14, %c0_15], %29 {strides = array<i32>} : memref<16x256xf32, #tpu.memory_space<vmem>>, vector<16x256xf32>,
    return
  }
}

</mosaic_0001>

<llo_original>
// kernel: tpu_custom_call.1
$region0: #{tpu_custom_call.1}
  #allocation0 [shape = 'u32[]', space=smem, size = 0x4, offset = 0x4, fixed_abs, tag = 'smem constant byte address 0x4 - core index']
  #allocation1 [shape = 'u32[144,128]{1,0:T(1,128)}', space=vmem, size = 0x12000, scoped, tag = 'internal scratch']
  %s0 = inlined_call_operand.hbm [shape: f32[16,256], index: 0, kind: input, shape index: {}]
  %s1 = inlined_call_operand.hbm [shape: bf16[256,256], index: 1, kind: input, shape index: {}]
  %s2 = inlined_call_operand.vmem [shape: f32[1,256], index: 2, kind: input, shape index: {}]
  %s3 = inlined_call_operand.vmem [shape: f32[1,256], index: 3, kind: input, shape index: {}]
  %s4 = inlined_call_operand.vmem [shape: f32[1,256], index: 4, kind: input, shape index: {}]
  %s5 = inlined_call_operand.hbm [shape: f32[16,256], index: 5, kind: output, shape index: {}]
  %s6 = sld [smem:[#allocation0]]
  $region38: #{tpu_custom_call.1} parent=0
    _
  %s8 = ssub.s32 1, %s6
  %s9 = scalar_select 0, %s8, %s6
  $region1: #{tpu_custom_call.1} parent=0
    #allocation2 [shape = 'u8[16384]{0}', space=vmem, size = 0x4000, scoped, tag = 'input window, operand 0, single buffered']
    #allocation3 [shape = 's32[1]{0}', space=sflag, size = 0x4, scoped, tag = 'scoped memory for tpu_custom_call.1']
    #allocation4 [shape = 's32[1]{0}', space=sflag, size = 0x4, scoped, tag = 'scoped memory for tpu_custom_call.1']
    #allocation5 [shape = 'u8[131072]{0}', space=vmem, size = 0x20000, scoped, tag = 'input window, operand 1, single buffered']
    #allocation6 [shape = 's32[1]{0}', space=sflag, size = 0x4, scoped, tag = 'scoped memory for tpu_custom_call.1']
    #allocation7 [shape = 'u8[16384]{0}', space=vmem, size = 0x4000, scoped, tag = 'output window, operand 0, single buffered']
    %10 = vsyncpa [#allocation3], 0
    %11 = vsyncpa [#allocation6], 0
    %12 = vsyncpa [#allocation4], 0
    // Predicated region
    $region2: #{tpu_custom_call.1} parent=1 // pred_check
      _
    $region3: #{tpu_custom_call.1} parent=1 // pred_check_branch
      %14 = sbr.rel (0) target = $region5
    $region4: #{tpu_custom_call.1} parent=1 // pred_region
      %s16 = ssub.s32 512, 512
      %17 = vsyncadd [#allocation3], %s16
      %s18 = sshll.u32 [#allocation2], 4
      %s19 = int_to_ptr.vmem [resolvable:$true] %s18
      %24 = dma.hbm_to_vmem [thread:$0]  %s0, 512, %s19, [#allocation3], 256, 256, 16
    $region5: #{tpu_custom_call.1} parent=1 // pred_fallthru
      _
    // Predicated region
    $region6: #{tpu_custom_call.1} parent=1 // pred_check
      _
    $region7: #{tpu_custom_call.1} parent=1 // pred_check_branch
      %26 = sbr.rel (0) target = $region9
    $region8: #{tpu_custom_call.1} parent=1 // pred_region
      %s28 = ssub.s32 4096, 4096
      %29 = vsyncadd [#allocation6], %s28
      %s30 = sshll.u32 [#allocation5], 4
      %s31 = int_to_ptr.vmem [resolvable:$true] %s30
      %36 = dma.hbm_to_vmem [thread:$0]  %s1, 4096, %s31, [#allocation6], 128, 128, 8
    $region9: #{tpu_custom_call.1} parent=1 // pred_fallthru
      _
    // Predicated region
    $region10: #{tpu_custom_call.1} parent=1 // pred_check
      _
    $region11: #{tpu_custom_call.1} parent=1 // pred_check_branch
      %38 = sbr.rel (0) target = $region13
    $region12: #{tpu_custom_call.1} parent=1 // pred_region
      _
    $region13: #{tpu_custom_call.1} parent=1 // pred_fallthru
      _
    // Predicated region
    $region14: #{tpu_custom_call.1} parent=1 // pred_check
      _
    $region15: #{tpu_custom_call.1} parent=1 // pred_check_branch
      %40 = sbr.rel (0) target = $region17
    $region16: #{tpu_custom_call.1} parent=1 // pred_region
      _
    $region17: #{tpu_custom_call.1} parent=1 // pred_fallthru
      _
    // Predicated region
    $region18: #{tpu_custom_call.1} parent=1 // pred_check
      _
    $region19: #{tpu_custom_call.1} parent=1 // pred_check_branch
      %42 = sbr.rel (0) target = $region21
    $region20: #{tpu_custom_call.1} parent=1 // pred_region
      _
    $region21: #{tpu_custom_call.1} parent=1 // pred_fallthru
      _
    // Predicated region
    $region22: #{tpu_custom_call.1} parent=1 // pred_check
      _
    $region23: #{tpu_custom_call.1} parent=1 // pred_check_branch
      %44 = sbr.rel (0) target = $region25
    $region24: #{tpu_custom_call.1} parent=1 // pred_region
      %45 = dma.done [#allocation3], 512
    $region25: #{tpu_custom_call.1} parent=1 // pred_fallthru
      _
    // Predicated region
    $region26: #{tpu_custom_call.1} parent=1 // pred_check
      _
    $region27: #{tpu_custom_call.1} parent=1 // pred_check_branch
      %47 = sbr.rel (0) target = $region29
    $region28: #{tpu_custom_call.1} parent=1 // pred_region
      %48 = dma.done [#allocation6], 4096
    $region29: #{tpu_custom_call.1} parent=1 // pred_fallthru
      _
    %v49 = vld [vmem:[#allocation2] sm:$0xff]
    %v50 = vld [vmem:[#allocation2 + $0x8] sm:$0xff]
    %v51 = vld [vmem:[#allocation2 + $0x10] sm:$0xff]
    %v52 = vld [vmem:[#allocation2 + $0x18] sm:$0xff]
    %v53 = vpack.c.bf16 %v51, %v49
    %v54 = vpack.c.bf16 %v52, %v50
    %v55 = vld [vmem:[#allocation5] sm:$0xff]
    %v56 = vld [vmem:[#allocation5 + $0x8] sm:$0xff]
    %v57 = vld [vmem:[#allocation5 + $0x10] sm:$0xff]
    %v58 = vld [vmem:[#allocation5 + $0x18] sm:$0xff]
    %v59 = vld [vmem:[#allocation5 + $0x20] sm:$0xff]
    %v60 = vld [vmem:[#allocation5 + $0x28] sm:$0xff]
    %v61 = vld [vmem:[#allocation5 + $0x30] sm:$0xff]
    %v62 = vld [vmem:[#allocation5 + $0x38] sm:$0xff]
    %v63 = vld [vmem:[#allocation5 + $0x40] sm:$0xff]
    %v64 = vld [vmem:[#allocation5 + $0x48] sm:$0xff]
    %v65 = vld [vmem:[#allocation5 + $0x50] sm:$0xff]
    %v66 = vld [vmem:[#allocation5 + $0x58] sm:$0xff]
    %v67 = vld [vmem:[#allocation5 + $0x60] sm:$0xff]
    %v68 = vld [vmem:[#allocation5 + $0x68] sm:$0xff]
    %v69 = vld [vmem:[#allocation5 + $0x70] sm:$0xff]
    %v70 = vld [vmem:[#allocation5 + $0x78] sm:$0xff]
    %v71 = vld [vmem:[#allocation5 + $0x80] sm:$0xff]
    %v72 = vld [vmem:[#allocation5 + $0x88] sm:$0xff]
    %v73 = vld [vmem:[#allocation5 + $0x90] sm:$0xff]
    %v74 = vld [vmem:[#allocation5 + $0x98] sm:$0xff]
    %v75 = vld [vmem:[#allocation5 + $0xa0] sm:$0xff]
    %v76 = vld [vmem:[#allocation5 + $0xa8] sm:$0xff]
    %v77 = vld [vmem:[#allocation5 + $0xb0] sm:$0xff]
    %v78 = vld [vmem:[#allocation5 + $0xb8] sm:$0xff]
    %v79 = vld [vmem:[#allocation5 + $0xc0] sm:$0xff]
    %v80 = vld [vmem:[#allocation5 + $0xc8] sm:$0xff]
    %v81 = vld [vmem:[#allocation5 + $0xd0] sm:$0xff]
    %v82 = vld [vmem:[#allocation5 + $0xd8] sm:$0xff]
    %v83 = vld [vmem:[#allocation5 + $0xe0] sm:$0xff]
    %v84 = vld [vmem:[#allocation5 + $0xe8] sm:$0xff]
    %v85 = vld [vmem:[#allocation5 + $0xf0] sm:$0xff]
    %v86 = vld [vmem:[#allocation5 + $0xf8] sm:$0xff]
    %v119 = vunpack.c.l.b16 %v55
    %v120 = vunpack.c.h.b16 %v55
    %v121 = vunpack.c.l.b16 %v56
    %v122 = vunpack.c.h.b16 %v56
    %v123 = vunpack.c.l.b16 %v57
    %v124 = vunpack.c.h.b16 %v57
    %v125 = vunpack.c.l.b16 %v58
    %v126 = vunpack.c.h.b16 %v58
    %v127 = vunpack.c.l.b16 %v59
    %v128 = vunpack.c.h.b16 %v59
    %v129 = vunpack.c.l.b16 %v60
    %v130 = vunpack.c.h.b16 %v60
    %v131 = vunpack.c.l.b16 %v61
    %v132 = vunpack.c.h.b16 %v61
    %v133 = vunpack.c.l.b16 %v62
    %v134 = vunpack.c.h.b16 %v62
    %v135 = vunpack.c.l.b16 %v63
    %v136 = vunpack.c.h.b16 %v63
    %v137 = vunpack.c.l.b16 %v64
    %v138 = vunpack.c.h.b16 %v64
    %v139 = vunpack.c.l.b16 %v65
    %v140 = vunpack.c.h.b16 %v65
    %v141 = vunpack.c.l.b16 %v66
    %v142 = vunpack.c.h.b16 %v66
    %v143 = vunpack.c.l.b16 %v67
    %v144 = vunpack.c.h.b16 %v67
    %v145 = vunpack.c.l.b16 %v68
    %v146 = vunpack.c.h.b16 %v68
    %v147 = vunpack.c.l.b16 %v69
    %v148 = vunpack.c.h.b16 %v69
    %v149 = vunpack.c.l.b16 %v70
    %v150 = vunpack.c.h.b16 %v70
    %v151 = vunpack.c.l.b16 %v71
    %v152 = vunpack.c.h.b16 %v71
    %v153 = vunpack.c.l.b16 %v72
    %v154 = vunpack.c.h.b16 %v72
    %v155 = vunpack.c.l.b16 %v73
    %v156 = vunpack.c.h.b16 %v73
    %v157 = vunpack.c.l.b16 %v74
    %v158 = vunpack.c.h.b16 %v74
    %v159 = vunpack.c.l.b16 %v75
    %v160 = vunpack.c.h.b16 %v75
    %v161 = vunpack.c.l.b16 %v76
    %v162 = vunpack.c.h.b16 %v76
    %v163 = vunpack.c.l.b16 %v77
    %v164 = vunpack.c.h.b16 %v77
    %v165 = vunpack.c.l.b16 %v78
    %v166 = vunpack.c.h.b16 %v78
    %v167 = vunpack.c.l.b16 %v79
    %v168 = vunpack.c.h.b16 %v79
    %v169 = vunpack.c.l.b16 %v80
    %v170 = vunpack.c.h.b16 %v80
    %v171 = vunpack.c.l.b16 %v81
    %v172 = vunpack.c.h.b16 %v81
    %v173 = vunpack.c.l.b16 %v82
    %v174 = vunpack.c.h.b16 %v82
    %v175 = vunpack.c.l.b16 %v83
    %v176 = vunpack.c.h.b16 %v83
    %v177 = vunpack.c.l.b16 %v84
    %v178 = vunpack.c.h.b16 %v84
    %v179 = vunpack.c.l.b16 %v85
    %v180 = vunpack.c.h.b16 %v85
    %v181 = vunpack.c.l.b16 %v86
    %v182 = vunpack.c.h.b16 %v86
    %v183 = vpack.c.b16 %v121, %v119
    %v184 = vpack.c.b16 %v122, %v120
    %v185 = vpack.c.b16 %v125, %v123
    %v186 = vpack.c.b16 %v126, %v124
    %v187 = vpack.c.b16 %v129, %v127
    %v188 = vpack.c.b16 %v130, %v128
    %v189 = vpack.c.b16 %v133, %v131
    %v190 = vpack.c.b16 %v134, %v132
    %v191 = vpack.c.b16 %v137, %v135
    %v192 = vpack.c.b16 %v138, %v136
    %v193 = vpack.c.b16 %v141, %v139
    %v194 = vpack.c.b16 %v142, %v140
    %v195 = vpack.c.b16 %v145, %v143
    %v196 = vpack.c.b16 %v146, %v144
    %v197 = vpack.c.b16 %v149, %v147
    %v198 = vpack.c.b16 %v150, %v148
    %v199 = vpack.c.b16 %v153, %v151
    %v200 = vpack.c.b16 %v154, %v152
    %v201 = vpack.c.b16 %v157, %v155
    %v202 = vpack.c.b16 %v158, %v156
    %v203 = vpack.c.b16 %v161, %v159
    %v204 = vpack.c.b16 %v162, %v160
    %v205 = vpack.c.b16 %v165, %v163
    %v206 = vpack.c.b16 %v166, %v164
    %v207 = vpack.c.b16 %v169, %v167
    %v208 = vpack.c.b16 %v170, %v168
    %v209 = vpack.c.b16 %v173, %v171
    %v210 = vpack.c.b16 %v174, %v172
    %v211 = vpack.c.b16 %v177, %v175
    %v212 = vpack.c.b16 %v178, %v176
    %v213 = vpack.c.b16 %v181, %v179
    %v214 = vpack.c.b16 %v182, %v180
    %247 = vmatprep.subr.bf16.mxu0 %v184
    %248 = vmatpush1.bf16.msra.mxu0 %v183
    %249 = vmatprep.subr.bf16.mxu0 %v186
    %250 = vmatpush1.bf16.msra.mxu0 %v185
    %251 = vmatprep.subr.bf16.mxu0 %v188
    %252 = vmatpush1.bf16.msra.mxu0 %v187
    %253 = vmatprep.subr.bf16.mxu0 %v190
    %254 = vmatpush1.bf16.msra.mxu0 %v189
    %255 = vmatprep.subr.bf16.mxu0 %v192
    %256 = vmatpush1.bf16.msra.mxu0 %v191
    %257 = vmatprep.subr.bf16.mxu0 %v194
    %258 = vmatpush1.bf16.msra.mxu0 %v193
    %259 = vmatprep.subr.bf16.mxu0 %v196
    %260 = vmatpush1.bf16.msra.mxu0 %v195
    %261 = vmatprep.subr.bf16.mxu0 %v198
    %262 = vmatpush1.bf16.msra.mxu0 %v197
    %263 = vmatprep.subr.bf16.mxu0 %v200
    %264 = vmatpush1.bf16.msra.mxu0 %v199
    %265 = vmatprep.subr.bf16.mxu0 %v202
    %266 = vmatpush1.bf16.msra.mxu0 %v201
    %267 = vmatprep.subr.bf16.mxu0 %v204
    %268 = vmatpush1.bf16.msra.mxu0 %v203
    %269 = vmatprep.subr.bf16.mxu0 %v206
    %270 = vmatpush1.bf16.msra.mxu0 %v205
    %271 = vmatprep.subr.bf16.mxu0 %v208
    %272 = vmatpush1.bf16.msra.mxu0 %v207
    %273 = vmatprep.subr.bf16.mxu0 %v210
    %274 = vmatpush1.bf16.msra.mxu0 %v209
    %275 = vmatprep.subr.bf16.mxu0 %v212
    %276 = vmatpush1.bf16.msra.mxu0 %v211
    %277 = vmatprep.subr.bf16.mxu0 %v214
    %278 = vmatpush1.bf16.msra.mxu0 %v213
    %279 = vmatprep.mubr.bf16.mxu0 %v54
    %280 = vmatmul.mubr.bf16.gmra.mrb[0].mxu0 %v53
    %v281 = vpop.f32.mrb[0].mxu0
    %v282 = vadd.f32 0.0, %v281
    %v283 = vpop.f32.mrb[0].mxu0
    %v284 = vadd.f32 0.0, %v283
    %v285 = vpop.f32.mrb[0].mxu0
    %v286 = vadd.f32 0.0, %v285
    %v287 = vpop.f32.mrb[0].mxu0
    %v288 = vadd.f32 0.0, %v287
    %289 = vdwg.mxu0
    %v290 = vadd.f32 %v49, %v282
    %v291 = vadd.f32 %v50, %v284
    %v292 = vadd.f32 %v51, %v286
    %v293 = vadd.f32 %v52, %v288
    %v294 = vld [vmem:[%s2] sm:$0x3]
    %v296 = vlaneseq
    %v297 = vshrl.u32 %v296, 7
    %v298 = vsub.s32 0, %v297
    %v299 = vrot.slane %v294, %v298
    %v300 = vlaneseq
    %v301 = vshrl.u32 %v300, 7
    %v302 = vsub.s32 1, %v301
    %v303 = vrot.slane %v294, %v302
    %v306 = vadd.f32 %v290, %v299
    %v307 = vadd.f32 %v291, %v303
    %v308 = vadd.f32 %v292, %v299
    %v309 = vadd.f32 %v293, %v303
    %v310 = vadd.f32 %v306, %v307
    %311 = vadd.xlane.f32.xlu0 %v310
    %v312 = vpop.xlane.xlu0 %311
    %v313 = vadd.f32 %v308, %v309
    %314 = vadd.xlane.f32.xlu0 %v313
    %v315 = vpop.xlane.xlu0 %314
    %v316 = vmul.f32 %v312, 0.00390625
    %v317 = vmul.f32 %v315, 0.00390625
    %v318 = vsub.f32 %v306, %v316
    %v319 = vsub.f32 %v307, %v316
    %v320 = vsub.f32 %v308, %v317
    %v321 = vsub.f32 %v309, %v317
    %v322 = vmul.f32 %v318, %v318
    %v323 = vmul.f32 %v319, %v319
    %v324 = vmul.f32 %v320, %v320
    %v325 = vmul.f32 %v321, %v321
    %v326 = vadd.f32 %v322, %v323
    %327 = vadd.xlane.f32.xlu0 %v326
    %v328 = vpop.xlane.xlu0 %327
    %v329 = vadd.f32 %v324, %v325
    %330 = vadd.xlane.f32.xlu0 %v329
    %v331 = vpop.xlane.xlu0 %330
    %v332 = vmul.f32 %v328, 0.00390625
    %v333 = vmul.f32 %v331, 0.00390625
    %v334 = vadd.f32 %v332, 1e-05
    %v335 = vadd.f32 %v333, 1e-05
    %v336 = vrsqrt.pop %v334
    %v337 = vrsqrt.pop %v335
    %v338 = vmul.f32 %v318, %v336
    %v339 = vmul.f32 %v319, %v336
    %v340 = vmul.f32 %v320, %v337
    %v341 = vmul.f32 %v321, %v337
    %v342 = vld [vmem:[%s3] sm:$0x3]
    %v344 = vlaneseq
    %v345 = vshrl.u32 %v344, 7
    %v346 = vsub.s32 0, %v345
    %v347 = vrot.slane %v342, %v346
    %v348 = vlaneseq
    %v349 = vshrl.u32 %v348, 7
    %v350 = vsub.s32 1, %v349
    %v351 = vrot.slane %v342, %v350
    %v354 = vmul.f32 %v338, %v347
    %v355 = vmul.f32 %v339, %v351
    %v356 = vmul.f32 %v340, %v347
    %v357 = vmul.f32 %v341, %v351
    %v358 = vld [vmem:[%s4] sm:$0x3]
    %v360 = vlaneseq
    %v361 = vshrl.u32 %v360, 7
    %v362 = vsub.s32 0, %v361
    %v363 = vrot.slane %v358, %v362
    %v364 = vlaneseq
    %v365 = vshrl.u32 %v364, 7
    %v366 = vsub.s32 1, %v365
    %v367 = vrot.slane %v358, %v366
    %v370 = vadd.f32 %v354, %v363
    %v371 = vadd.f32 %v355, %v367
    %v372 = vadd.f32 %v356, %v363
    %v373 = vadd.f32 %v357, %v367
    %374 = vst [vmem:[#allocation7] sm:$0xff] %v370
    %375 = vst [vmem:[#allocation7 + $0x8] sm:$0xff] %v371
    %376 = vst [vmem:[#allocation7 + $0x10] sm:$0xff] %v372
    %377 = vst [vmem:[#allocation7 + $0x18] sm:$0xff] %v373
    // Predicated region
    $region30: #{tpu_custom_call.1} parent=1 // pred_check
      _
    $region31: #{tpu_custom_call.1} parent=1 // pred_check_branch
      %379 = sbr.rel (0) target = $region33
    $region32: #{tpu_custom_call.1} parent=1 // pred_region
      %s381 = ssub.s32 512, 512
      %382 = vsyncadd [#allocation4], %s381
      %s383 = sshll.u32 [#allocation7], 4
      %s384 = int_to_ptr.vmem [resolvable:$true] %s383
      %389 = dma.vmem_to_hbm [thread:$0]  %s384, 512, %s5, [#allocation4], 256, 256, 16
    $region33: #{tpu_custom_call.1} parent=1 // pred_fallthru
      _
    // Predicated region
    $region34: #{tpu_custom_call.1} parent=1 // pred_check
      _
    $region35: #{tpu_custom_call.1} parent=1 // pred_check_branch
      %391 = sbr.rel (0) target = $region37
    $region36: #{tpu_custom_call.1} parent=1 // pred_region
      %392 = dma.done [#allocation4], 512
    $region37: #{tpu_custom_call.1} parent=1 // pred_fallthru
      _
    %393 = vsyncpa [#allocation3], 1
    %394 = vsyncpa [#allocation6], 1
    %395 = vsyncpa [#allocation4], 1

</llo_original>
